<compile_context>
chip_gen: v7x
topology: tpu7x:2x2x1
jax: 0.10.0
libtpu: 0.0.40
codegen_flags: <defaults>
</compile_context>

<pallas_src>
import functools

import jax
import jax.numpy as jnp
from jax.experimental import pallas as pl
from jax.experimental.pallas import tpu as pltpu


def _round_up(x, m):
    return ((x + m - 1) // m) * m


def policy_net_kernel(x_ref, w1_ref, b1_ref, w2_ref, b2_ref, w3_ref, b3_ref,
                      o_ref, *, matmul_dtype):
    """One batch tile: 3 matmuls + 2 ReLUs + row softmax, fully in VMEM."""
    mm_kwargs = dict(preferred_element_type=jnp.float32)
    if matmul_dtype == jnp.float32:
        # Bit-tight f32 path (multi-pass MXU); bf16 default avoids this.
        mm_kwargs["precision"] = jax.lax.Precision.HIGHEST

    x = x_ref[...].astype(matmul_dtype)                                # (TB, S)

    # fc1 + ReLU  (bias add / ReLU in f32 -> safe on v5e's f32-only VPU)
    h1 = jnp.maximum(jnp.dot(x, w1_ref[...], **mm_kwargs) + b1_ref[...], 0.0)

    # fc2 + ReLU
    h2 = jnp.maximum(
        jnp.dot(h1.astype(matmul_dtype), w2_ref[...], **mm_kwargs) + b2_ref[...],
        0.0)

    # fc3 (padded logit lanes carry a -1e30 bias -> exp() == 0 below)
    logits = jnp.dot(h2.astype(matmul_dtype), w3_ref[...], **mm_kwargs)
    logits = logits + b3_ref[...]                                      # (TB, Ap)

    # Numerically stable softmax over dim=1 (matches F.softmax semantics).
    # Exact divide: approx reciprocal previously broke the 1e-5 row-sum check.
    m = jnp.max(logits, axis=1, keepdims=True)
    e = jnp.exp(logits - m)
    denom = jnp.sum(e, axis=1, keepdims=True)
    o_ref[...] = (e / denom).astype(o_ref.dtype)


def init_params(key, state_dim, hidden_dim, action_dim):
    """Deterministic init mirroring torch.nn.Linear.

    PyTorch stores Linear weight as (out, in); we store the transpose
    (in, out) so the kernel computes x @ W.  Biases reshaped to (1, out).
    """
    k1, k2, k3, k4, k5, k6 = jax.random.split(key, 6)

    def lin(kw, kb, fan_in, fan_out):
        bound = 1.0 / jnp.sqrt(fan_in)
        w = jax.random.uniform(kw, (fan_in, fan_out), jnp.float32,
                               minval=-bound, maxval=bound)
        b = jax.random.uniform(kb, (1, fan_out), jnp.float32,
                               minval=-bound, maxval=bound)
        return w, b

    w1, b1 = lin(k1, k2, state_dim, hidden_dim)
    w2, b2 = lin(k3, k4, hidden_dim, hidden_dim)
    w3, b3 = lin(k5, k6, hidden_dim, action_dim)
    return dict(w1=w1, b1=b1, w2=w2, b2=b2, w3=w3, b3=b3)


def pad_and_cast_params(params, *, matmul_dtype=jnp.bfloat16, neg_fill=-1e30):
    """Pad hidden/action dims to lane-dense multiples of 128; pre-cast weights.

    Zero-padding is exact for the hidden layers (ReLU(0)=0, zero weight rows
    contribute nothing).  The padded fc3 bias lanes get -1e30 so their exp()
    underflows to 0 and the softmax over the real action lanes is unchanged.
    Biases stay f32 (elementwise math is f32 on all chip generations).
    """
    w1, b1 = params["w1"], params["b1"]
    w2, b2 = params["w2"], params["b2"]
    w3, b3 = params["w3"], params["b3"]

    S, H = w1.shape
    A = w3.shape[1]
    Hp = _round_up(H, 128)
    Ap = _round_up(A, 128)

    def pad2(a, rows, cols, fill=0.0):
        return jnp.pad(a, ((0, rows - a.shape[0]), (0, cols - a.shape[1])),
                       constant_values=fill)

    return dict(
        w1=pad2(w1, S, Hp).astype(matmul_dtype),
        b1=pad2(b1, 1, Hp),
        w2=pad2(w2, Hp, Hp).astype(matmul_dtype),
        b2=pad2(b2, 1, Hp),
        w3=pad2(w3, Hp, Ap).astype(matmul_dtype),
        b3=pad2(b3, 1, Ap, fill=neg_fill),
        action_dim=A,
    )


def policy_net_forward(x, padded_params, *, tile_b=None):
    """x: (batch, state_dim) float32. padded_params: from pad_and_cast_params.

    Returns (batch, action_dim) float32 softmax probabilities.
    """
    w1, b1 = padded_params["w1"], padded_params["b1"]
    w2, b2 = padded_params["w2"], padded_params["b2"]
    w3, b3 = padded_params["w3"], padded_params["b3"]
    action_dim = padded_params["action_dim"]

    batch, state_dim = x.shape
    hidden_p = w1.shape[1]
    out_lanes = w3.shape[1]
    matmul_dtype = w1.dtype

    # Batch tile selection:
    #  * small batch -> one grid step (minimize per-step overhead on 1-TC
    #    v5e/v6e; "parallel" semantics is a no-op there anyway).
    #  * batch >= 256 -> at least 2 steps so both v7x TensorCores get work;
    #    cap at 256 rows/step to keep (tile_b, 128) f32 temporaries from
    #    blowing vreg/spill budget.
    if tile_b is None:
        if batch < 256:
            tile_b = batch
        else:
            tile_b = min(256, _round_up(pl.cdiv(batch, 2), 8))
    tile_b = min(tile_b, batch)
    grid = (pl.cdiv(batch, tile_b),)

    # Weights/biases: constant block index across the grid -> fetched once,
    # held VMEM-resident for every batch tile.
    const = lambda a: pl.BlockSpec(a.shape, lambda i: (0, 0))

    kernel = functools.partial(policy_net_kernel, matmul_dtype=matmul_dtype)

    param_list = [w1, b1, w2, b2, w3, b3]
    bytes_accessed = (x.size * x.dtype.itemsize
                      + sum(int(p.size) * p.dtype.itemsize for p in param_list)
                      + batch * out_lanes * 4)
    cost = pl.CostEstimate(
        flops=2 * batch * (state_dim * hidden_p + hidden_p * hidden_p
                           + hidden_p * out_lanes),
        transcendentals=batch * out_lanes,
        bytes_accessed=bytes_accessed,
    )

    out = pl.pallas_call(
        kernel,
        out_shape=jax.ShapeDtypeStruct((batch, out_lanes), jnp.float32),
        grid=grid,
        in_specs=[
            pl.BlockSpec((tile_b, state_dim), lambda i: (i, 0)),       # x tiles
            const(w1), const(b1), const(w2), const(b2), const(w3), const(b3),
        ],
        out_specs=pl.BlockSpec((tile_b, out_lanes), lambda i: (i, 0)),
        compiler_params=pltpu.CompilerParams(
            dimension_semantics=("parallel",)),   # megacore / dual-TC on v7x
        cost_estimate=cost,
    )(x, w1, b1, w2, b2, w3, b3)

    # Padded logit lanes have exactly-zero probability; drop them.
    return out[:, :action_dim]


def reference_forward(x, params, matmul_dtype=jnp.bfloat16):
    """Plain-JAX reference with the same MXU input dtype / f32 accumulation."""
    def mm(a, w):
        return jnp.dot(a.astype(matmul_dtype), w.astype(matmul_dtype),
                       preferred_element_type=jnp.float32)
    h1 = jnp.maximum(mm(x, params["w1"]) + params["b1"], 0.0)
    h2 = jnp.maximum(mm(h1, params["w2"]) + params["b2"], 0.0)
    logits = mm(h2, params["w3"]) + params["b3"]
    return jax.nn.softmax(logits, axis=1)


if __name__ == "__main__":
    state_dim, hidden_dim, action_dim = 16, 32, 4
    batch = 256          # -> 2 batch tiles of 128 rows (exercises the grid)

    key = jax.random.PRNGKey(0)
    kx, kp = jax.random.split(key)
    x = jax.random.normal(kx, (batch, state_dim), dtype=jnp.float32)

    params = init_params(kp, state_dim, hidden_dim, action_dim)
    padded = pad_and_cast_params(params, matmul_dtype=jnp.bfloat16)

    probs = policy_net_forward(x, padded)
    probs = jax.block_until_ready(probs)

    # Reference with matching bf16 MXU inputs (tight) and full-f32 (loose).
    ref_bf16 = reference_forward(x, params, matmul_dtype=jnp.bfloat16)
    hp = jax.lax.Precision.HIGHEST
    h1 = jnp.maximum(jnp.dot(x, params["w1"], precision=hp) + params["b1"], 0.0)
    h2 = jnp.maximum(jnp.dot(h1, params["w2"], precision=hp) + params["b2"], 0.0)
    ref_f32 = jax.nn.softmax(
        jnp.dot(h2, params["w3"], precision=hp) + params["b3"], axis=1)

    assert probs.shape == (batch, action_dim)
    assert bool(jnp.all(probs >= 0.0))
    assert bool(jnp.allclose(jnp.sum(probs, axis=1), 1.0, atol=1e-5))
    assert bool(jnp.allclose(probs, ref_bf16, atol=2e-3))
    assert bool(jnp.allclose(probs, ref_f32, atol=5e-2))

    print("KERNEL_OK")
</pallas_src>

<mosaic_0001>
module attributes {stable_mosaic.version = 11 : i64} {
  func.func @policy_net_kernel(%arg0: i32, %arg1: memref<128x16xf32, #tpu.memory_space<vmem>>, %arg2: memref<16x128xbf16, #tpu.memory_space<vmem>>, %arg3: memref<1x128xf32, #tpu.memory_space<vmem>>, %arg4: memref<128x128xbf16, #tpu.memory_space<vmem>>, %arg5: memref<1x128xf32, #tpu.memory_space<vmem>>, %arg6: memref<128x128xbf16, #tpu.memory_space<vmem>>, %arg7: memref<1x128xf32, #tpu.memory_space<vmem>>, %arg8: memref<128x128xf32, #tpu.memory_space<vmem>>) attributes {dimension_semantics = [#tpu.dimension_semantics<parallel>], iteration_bounds = array<i64: 2>, scalar_prefetch = 0 : i64, scratch_operands = 0 : i64, tpu.core_type = #tpu.core_type<tc>, window_params = [{transform_indices = @transform_0, window_bounds = array<i64: 128, 16>}, {pipeline_mode = #tpu.pipeline_mode<synchronous>, transform_indices = @transform_1, window_bounds = array<i64: 16, 128>}, {pipeline_mode = #tpu.pipeline_mode<synchronous>, transform_indices = @transform_2, window_bounds = array<i64: 1, 128>}, {pipeline_mode = #tpu.pipeline_mode<synchronous>, transform_indices = @transform_3, window_bounds = array<i64: 128, 128>}, {pipeline_mode = #tpu.pipeline_mode<synchronous>, transform_indices = @transform_4, window_bounds = array<i64: 1, 128>}, {pipeline_mode = #tpu.pipeline_mode<synchronous>, transform_indices = @transform_5, window_bounds = array<i64: 128, 128>}, {pipeline_mode = #tpu.pipeline_mode<synchronous>, transform_indices = @transform_6, window_bounds = array<i64: 1, 128>}, {transform_indices = @transform_7, window_bounds = array<i64: 128, 128>}]} {
    %c0 = arith.constant 0 : index
    %c0_0 = arith.constant 0 : index
    %0 = vector.load %arg1[%c0, %c0_0] : memref<128x16xf32, #tpu.memory_space<vmem>>, vector<128x16xf32>
    %1 = arith.truncf %0 : vector<128x16xf32> to vector<128x16xbf16>
    %c0_1 = arith.constant 0 : index
    %c0_2 = arith.constant 0 : index
    %2 = vector.load %arg2[%c0_1, %c0_2] : memref<16x128xbf16, #tpu.memory_space<vmem>>, vector<16x128xbf16>
    %cst = arith.constant dense<0.000000e+00> : vector<128x128xf32>
    %3 = tpu.matmul %1, %2, %cst {dimension_numbers = #tpu.dot_dimension_numbers<[1], [0], [0], [1], [0, 0, 1, 1], [], []>} : vector<128x16xbf16>, vector<16x128xbf16>, vector<128x128xf32> -> vector<128x128xf32>
    %c0_3 = arith.constant 0 : index
    %c0_4 = arith.constant 0 : index
    %4 = vector.load %arg3[%c0_3, %c0_4] : memref<1x128xf32, #tpu.memory_space<vmem>>, vector<1x128xf32>
    %5 = vector.broadcast %4 : vector<1x128xf32> to vector<128x128xf32>
    %6 = arith.addf %3, %5 : vector<128x128xf32>
    %cst_5 = arith.constant 0.000000e+00 : f32
    %7 = vector.broadcast %cst_5 : f32 to vector<128x128xf32>
    %8 = arith.maximumf %6, %7 : vector<128x128xf32>
    %9 = arith.truncf %8 : vector<128x128xf32> to vector<128x128xbf16>
    %c0_6 = arith.constant 0 : index
    %c0_7 = arith.constant 0 : index
    %10 = vector.load %arg4[%c0_6, %c0_7] : memref<128x128xbf16, #tpu.memory_space<vmem>>, vector<128x128xbf16>
    %cst_8 = arith.constant dense<0.000000e+00> : vector<128x128xf32>
    %11 = tpu.matmul %9, %10, %cst_8 {dimension_numbers = #tpu.dot_dimension_numbers<[1], [0], [0], [1], [0, 0, 1, 1], [], []>} : vector<128x128xbf16>, vector<128x128xbf16>, vector<128x128xf32> -> vector<128x128xf32>
    %c0_9 = arith.constant 0 : index
    %c0_10 = arith.constant 0 : index
    %12 = vector.load %arg5[%c0_9, %c0_10] : memref<1x128xf32, #tpu.memory_space<vmem>>, vector<1x128xf32>
    %13 = vector.broadcast %12 : vector<1x128xf32> to vector<128x128xf32>
    %14 = arith.addf %11, %13 : vector<128x128xf32>
    %cst_11 = arith.constant 0.000000e+00 : f32
    %15 = vector.broadcast %cst_11 : f32 to vector<128x128xf32>
    %16 = arith.maximumf %14, %15 : vector<128x128xf32>
    %17 = arith.truncf %16 : vector<128x128xf32> to vector<128x128xbf16>
    %c0_12 = arith.constant 0 : index
    %c0_13 = arith.constant 0 : index
    %18 = vector.load %arg6[%c0_12, %c0_13] : memref<128x128xbf16, #tpu.memory_space<vmem>>, vector<128x128xbf16>
    %cst_14 = arith.constant dense<0.000000e+00> : vector<128x128xf32>
    %19 = tpu.matmul %17, %18, %cst_14 {dimension_numbers = #tpu.dot_dimension_numbers<[1], [0], [0], [1], [0, 0, 1, 1], [], []>} : vector<128x128xbf16>, vector<128x128xbf16>, vector<128x128xf32> -> vector<128x128xf32>
    %c0_15 = arith.constant 0 : index
    %c0_16 = arith.constant 0 : index
    %20 = vector.load %arg7[%c0_15, %c0_16] : memref<1x128xf32, #tpu.memory_space<vmem>>, vector<1x128xf32>
    %21 = vector.broadcast %20 : vector<1x128xf32> to vector<128x128xf32>
    %22 = arith.addf %19, %21 : vector<128x128xf32>
    %cst_17 = arith.constant dense<0xFF800000> : vector<128xf32>
    %23 = vector.multi_reduction <maximumf>, %22, %cst_17 [1] : vector<128x128xf32> to vector<128xf32>
    %24 = vector.shape_cast %23 : vector<128xf32> to vector<128x1xf32>
    %25 = vector.broadcast %24 : vector<128x1xf32> to vector<128x128xf32>
    %26 = arith.subf %22, %25 : vector<128x128xf32>
    %27 = math.exp %26 : vector<128x128xf32>
    %cst_18 = arith.constant dense<0.000000e+00> : vector<128xf32>
    %28 = vector.multi_reduction <add>, %27, %cst_18 [1] : vector<128x128xf32> to vector<128xf32>
    %29 = vector.shape_cast %28 : vector<128xf32> to vector<128x1xf32>
    %30 = vector.broadcast %29 : vector<128x1xf32> to vector<128x128xf32>
    %31 = arith.divf %27, %30 : vector<128x128xf32>
    %c0_19 = arith.constant 0 : index
    %c0_20 = arith.constant 0 : index
    %32 = vector.load %arg8[%c0_19, %c0_20] : memref<128x128xf32, #tpu.memory_space<vmem>>, vector<128x128xf32>
    tpu.vector_store %arg8[%c0_19, %c0_20], %31 {strides = array<i32>} : memref<128x128xf32, #tpu.memory_space<vmem>>, vector<128x128xf32>,
    return
  }
  func.func @transform_0(%arg0: i32) -> (i32, i32) {
    %c0_i32 = arith.constant 0 : i32
    %c0_i32_0 = arith.constant 0 : i32
    return %arg0, %c0_i32 : i32, i32
  }
  func.func @transform_1(%arg0: i32) -> (i32, i32) {
    %c0_i32 = arith.constant 0 : i32
    %c0_i32_0 = arith.constant 0 : i32
    %c0_i32_1 = arith.constant 0 : i32
    return %c0_i32, %c0_i32_0 : i32, i32
  }
  func.func @transform_2(%arg0: i32) -> (i32, i32) {
    %c0_i32 = arith.constant 0 : i32
    %c0_i32_0 = arith.constant 0 : i32
    %c0_i32_1 = arith.constant 0 : i32
    return %c0_i32, %c0_i32_0 : i32, i32
  }
  func.func @transform_3(%arg0: i32) -> (i32, i32) {
    %c0_i32 = arith.constant 0 : i32
    %c0_i32_0 = arith.constant 0 : i32
    %c0_i32_1 = arith.constant 0 : i32
    return %c0_i32, %c0_i32_0 : i32, i32
  }
  func.func @transform_4(%arg0: i32) -> (i32, i32) {
    %c0_i32 = arith.constant 0 : i32
    %c0_i32_0 = arith.constant 0 : i32
    %c0_i32_1 = arith.constant 0 : i32
    return %c0_i32, %c0_i32_0 : i32, i32
  }
  func.func @transform_5(%arg0: i32) -> (i32, i32) {
    %c0_i32 = arith.constant 0 : i32
    %c0_i32_0 = arith.constant 0 : i32
    %c0_i32_1 = arith.constant 0 : i32
    return %c0_i32, %c0_i32_0 : i32, i32
  }
  func.func @transform_6(%arg0: i32) -> (i32, i32) {
    %c0_i32 = arith.constant 0 : i32
    %c0_i32_0 = arith.constant 0 : i32
    %c0_i32_1 = arith.constant 0 : i32
    return %c0_i32, %c0_i32_0 : i32, i32
  }
  func.func @transform_7(%arg0: i32) -> (i32, i32) {
    %c0_i32 = arith.constant 0 : i32
    %c0_i32_0 = arith.constant 0 : i32
    return %arg0, %c0_i32 : i32, i32
  }
}

</mosaic_0001>

<llo_original>
// kernel: tpu_custom_call.1
$region0: #{tpu_custom_call.1}
  #allocation0 [shape = 'u32[]', space=smem, size = 0x4, offset = 0x4, fixed_abs, tag = 'smem constant byte address 0x4 - core index']
  #allocation1 [shape = 'u32[144,128]{1,0:T(1,128)}', space=vmem, size = 0x12000, scoped, tag = 'internal scratch']
  %s0 = inlined_call_operand.vmem [shape: f32[256,16], index: 0, kind: input, shape index: {}]
  %s1 = inlined_call_operand.vmem [shape: bf16[16,128], index: 1, kind: input, shape index: {}]
  %s2 = inlined_call_operand.vmem [shape: f32[1,128], index: 2, kind: input, shape index: {}]
  %s3 = inlined_call_operand.vmem [shape: bf16[128,128], index: 3, kind: input, shape index: {}]
  %s4 = inlined_call_operand.vmem [shape: f32[1,128], index: 4, kind: input, shape index: {}]
  %s5 = inlined_call_operand.vmem [shape: bf16[128,128], index: 5, kind: input, shape index: {}]
  %s6 = inlined_call_operand.vmem [shape: f32[1,128], index: 6, kind: input, shape index: {}]
  %s7 = inlined_call_operand.hbm [shape: f32[256,128], index: 7, kind: output, shape index: {}]
  %s8 = sld [smem:[#allocation0]]
  $region61: #{tpu_custom_call.1} parent=0
    _
  %s10 = ssub.s32 1, %s8
  %s11 = scalar_select 0, %s10, %s8
  $region1: #{tpu_custom_call.1} parent=0
    #allocation2 [shape = 'u8[131072]{0}', space=vmem, size = 0x20000, scoped, tag = 'output window, operand 0']
    #allocation3 [shape = 's32[2]{0}', space=sflag, size = 0x8, scoped, tag = 'scoped memory for tpu_custom_call.1']
    %12 = vsyncpa [#allocation3], 0
    %s13 = scalar_lea.sflag [#allocation3], 1
    %14 = vsyncpa %s13, 0
    loop: start=0, step=1, limit=4
    $region2: #{tpu_custom_call.1} parent=1 // loop_pre_header
      _
    $region3: #{tpu_custom_call.1} parent=1 // loop_header
      %s16 = sphi 0, %s20
      %p17 = scmp.ge.s32.totalorder %s16, 4
      %s26 = sphi 0, %s28
      %s29 = sphi 0, %s26
      %s30 = sphi 0, %s29
      %s46 = sphi 0, %s30
      %s50 = sphi 0, %s50
      %s52 = sphi 0, %s50
      %s53 = sphi 0, %s52
      %s67 = sphi 0, %s53
      %s71 = sphi 0, %s71
      %s73 = sphi 0, %s71
      %s74 = sphi 0, %s73
      %s88 = sphi 0, %s74
      %s92 = sphi 0, %s92
      %s94 = sphi 0, %s92
      %s95 = sphi 0, %s94
      %s109 = sphi 0, %s95
      %s113 = sphi 0, %s113
      %s115 = sphi 0, %s113
      %s116 = sphi 0, %s115
      %s130 = sphi 0, %s116
      %s134 = sphi 0, %s134
      %s136 = sphi 0, %s134
      %s137 = sphi 0, %s136
      %s151 = sphi 0, %s137
      %s155 = sphi 0, %s155
      %s157 = sphi 0, %s155
      %s158 = sphi 0, %s157
      %s172 = sphi 0, %s158
      %s178 = sphi 0, %s180
      %s181 = sphi 0, %s178
      %s182 = sphi 0, %s181
      %s198 = sphi 0, %s182
    $region4: #{tpu_custom_call.1} parent=1 // loop_header_branch
      %19 = sbr.rel (%p17) target = $region8
    $region5: #{tpu_custom_call.1} parent=1 // loop_body
      %s21 = ssub.s32 %s16, 1
      %s22 = ssub.s32 %s16, 2
      %s23 = sadd.s32 %s16, 1
      %s24 = ssub.s32 %s16, %s23
      %p25 = scmp.eq.s32.totalorder %s24, 0
      %s27 = sadd.s32 %s26, 1
      %s28 = scalar_select %p25, %s26, %s27
      %p31 = pneg %p25
      %p32 = scmp.eq.s32.totalorder %s16, 1
      %p33 = por %p31, %p32
      %p34 = scmp.ne.s32.totalorder %s26, %s29
      %p35 = scmp.eq.s32.totalorder %s16, 0
      %p36 = por %p34, %p35
      %p37 = scmp.ne.s32.totalorder %s26, %s29
      %p38 = scmp.eq.s32.totalorder %s21, 1
      %p39 = por %p37, %p38
      %p40 = scmp.ne.s32.totalorder %s29, %s30
      %p41 = scmp.eq.s32.totalorder %s21, 0
      %p42 = por %p40, %p41
      %p43 = scmp.ne.s32.totalorder %s29, %s30
      %p44 = scmp.eq.s32.totalorder %s22, 1
      %p45 = por %p43, %p44
      %p47 = scmp.ne.s32.totalorder %s30, %s46
      %p48 = scmp.eq.s32.totalorder %s22, 0
      %p49 = por %p47, %p48
      %s51 = sadd.s32 %s50, 1
      %p54 = scmp.eq.s32.totalorder %s16, 1
      %p55 = scmp.ne.s32.totalorder %s50, %s52
      %p56 = scmp.eq.s32.totalorder %s16, 0
      %p57 = por %p55, %p56
      %p58 = scmp.ne.s32.totalorder %s50, %s52
      %p59 = scmp.eq.s32.totalorder %s21, 1
      %p60 = por %p58, %p59
      %p61 = scmp.ne.s32.totalorder %s52, %s53
      %p62 = scmp.eq.s32.totalorder %s21, 0
      %p63 = por %p61, %p62
      %p64 = scmp.ne.s32.totalorder %s52, %s53
      %p65 = scmp.eq.s32.totalorder %s22, 1
      %p66 = por %p64, %p65
      %p68 = scmp.ne.s32.totalorder %s53, %s67
      %p69 = scmp.eq.s32.totalorder %s22, 0
      %p70 = por %p68, %p69
      %s72 = sadd.s32 %s71, 1
      %p75 = scmp.eq.s32.totalorder %s16, 1
      %p76 = scmp.ne.s32.totalorder %s71, %s73
      %p77 = scmp.eq.s32.totalorder %s16, 0
      %p78 = por %p76, %p77
      %p79 = scmp.ne.s32.totalorder %s71, %s73
      %p80 = scmp.eq.s32.totalorder %s21, 1
      %p81 = por %p79, %p80
      %p82 = scmp.ne.s32.totalorder %s73, %s74
      %p83 = scmp.eq.s32.totalorder %s21, 0
      %p84 = por %p82, %p83
      %p85 = scmp.ne.s32.totalorder %s73, %s74
      %p86 = scmp.eq.s32.totalorder %s22, 1
      %p87 = por %p85, %p86
      %p89 = scmp.ne.s32.totalorder %s74, %s88
      %p90 = scmp.eq.s32.totalorder %s22, 0
      %p91 = por %p89, %p90
      %s93 = sadd.s32 %s92, 1
      %p96 = scmp.eq.s32.totalorder %s16, 1
      %p97 = scmp.ne.s32.totalorder %s92, %s94
      %p98 = scmp.eq.s32.totalorder %s16, 0
      %p99 = por %p97, %p98
      %p100 = scmp.ne.s32.totalorder %s92, %s94
      %p101 = scmp.eq.s32.totalorder %s21, 1
      %p102 = por %p100, %p101
      %p103 = scmp.ne.s32.totalorder %s94, %s95
      %p104 = scmp.eq.s32.totalorder %s21, 0
      %p105 = por %p103, %p104
      %p106 = scmp.ne.s32.totalorder %s94, %s95
      %p107 = scmp.eq.s32.totalorder %s22, 1
      %p108 = por %p106, %p107
      %p110 = scmp.ne.s32.totalorder %s95, %s109
      %p111 = scmp.eq.s32.totalorder %s22, 0
      %p112 = por %p110, %p111
      %s114 = sadd.s32 %s113, 1
      %p117 = scmp.eq.s32.totalorder %s16, 1
      %p118 = scmp.ne.s32.totalorder %s113, %s115
      %p119 = scmp.eq.s32.totalorder %s16, 0
      %p120 = por %p118, %p119
      %p121 = scmp.ne.s32.totalorder %s113, %s115
      %p122 = scmp.eq.s32.totalorder %s21, 1
      %p123 = por %p121, %p122
      %p124 = scmp.ne.s32.totalorder %s115, %s116
      %p125 = scmp.eq.s32.totalorder %s21, 0
      %p126 = por %p124, %p125
      %p127 = scmp.ne.s32.totalorder %s115, %s116
      %p128 = scmp.eq.s32.totalorder %s22, 1
      %p129 = por %p127, %p128
      %p131 = scmp.ne.s32.totalorder %s116, %s130
      %p132 = scmp.eq.s32.totalorder %s22, 0
      %p133 = por %p131, %p132
      %s135 = sadd.s32 %s134, 1
      %p138 = scmp.eq.s32.totalorder %s16, 1
      %p139 = scmp.ne.s32.totalorder %s134, %s136
      %p140 = scmp.eq.s32.totalorder %s16, 0
      %p141 = por %p139, %p140
      %p142 = scmp.ne.s32.totalorder %s134, %s136
      %p143 = scmp.eq.s32.totalorder %s21, 1
      %p144 = por %p142, %p143
      %p145 = scmp.ne.s32.totalorder %s136, %s137
      %p146 = scmp.eq.s32.totalorder %s21, 0
      %p147 = por %p145, %p146
      %p148 = scmp.ne.s32.totalorder %s136, %s137
      %p149 = scmp.eq.s32.totalorder %s22, 1
      %p150 = por %p148, %p149
      %p152 = scmp.ne.s32.totalorder %s137, %s151
      %p153 = scmp.eq.s32.totalorder %s22, 0
      %p154 = por %p152, %p153
      %s156 = sadd.s32 %s155, 1
      %p159 = scmp.eq.s32.totalorder %s16, 1
      %p160 = scmp.ne.s32.totalorder %s155, %s157
      %p161 = scmp.eq.s32.totalorder %s16, 0
      %p162 = por %p160, %p161
      %p163 = scmp.ne.s32.totalorder %s155, %s157
      %p164 = scmp.eq.s32.totalorder %s21, 1
      %p165 = por %p163, %p164
      %p166 = scmp.ne.s32.totalorder %s157, %s158
      %p167 = scmp.eq.s32.totalorder %s21, 0
      %p168 = por %p166, %p167
      %p169 = scmp.ne.s32.totalorder %s157, %s158
      %p170 = scmp.eq.s32.totalorder %s22, 1
      %p171 = por %p169, %p170
      %p173 = scmp.ne.s32.totalorder %s158, %s172
      %p174 = scmp.eq.s32.totalorder %s22, 0
      %p175 = por %p173, %p174
      %s176 = ssub.s32 %s16, %s23
      %p177 = scmp.eq.s32.totalorder %s176, 0
      %s179 = sadd.s32 %s178, 1
      %s180 = scalar_select %p177, %s178, %s179
      %p183 = pneg %p177
      %p184 = scmp.eq.s32.totalorder %s16, 1
      %p185 = por %p183, %p184
      %p186 = scmp.ne.s32.totalorder %s178, %s181
      %p187 = scmp.eq.s32.totalorder %s16, 0
      %p188 = por %p186, %p187
      %p189 = scmp.ne.s32.totalorder %s178, %s181
      %p190 = scmp.eq.s32.totalorder %s21, 1
      %p191 = por %p189, %p190
      %p192 = scmp.ne.s32.totalorder %s181, %s182
      %p193 = scmp.eq.s32.totalorder %s21, 0
      %p194 = por %p192, %p193
      %p195 = scmp.ne.s32.totalorder %s181, %s182
      %p196 = scmp.eq.s32.totalorder %s22, 1
      %p197 = por %p195, %p196
      %p199 = scmp.ne.s32.totalorder %s182, %s198
      %p200 = scmp.eq.s32.totalorder %s22, 0
      %p201 = por %p199, %p200
      %p202 = scmp.le.s32.totalorder 1, %s16
      %p203 = scmp.lt.s32.totalorder %s16, 3
      %p204 = pnand %p202, %p203
      %p205 = pneg %p204
      // Predicated region
      $region9: #{tpu_custom_call.1} parent=5 // pred_check
        _
      $region10: #{tpu_custom_call.1} parent=5 // pred_check_branch
        %207 = sbr.rel (%p204) target = $region12
      $region11: #{tpu_custom_call.1} parent=5 // pred_region
        %s208 = ssub.s32 %s16, 1
        // Predicated region
        $region13: #{tpu_custom_call.1} parent=11 // pred_check
          %p209 = pneg %p63
        $region14: #{tpu_custom_call.1} parent=11 // pred_check_branch
          %211 = sbr.rel (%p209) target = $region16
        $region15: #{tpu_custom_call.1} parent=11 // pred_region
          _
        $region16: #{tpu_custom_call.1} parent=11 // pred_fallthru
          _
        // Predicated region
        $region17: #{tpu_custom_call.1} parent=11 // pred_check
          %p212 = pneg %p84
        $region18: #{tpu_custom_call.1} parent=11 // pred_check_branch
          %214 = sbr.rel (%p212) target = $region20
        $region19: #{tpu_custom_call.1} parent=11 // pred_region
          _
        $region20: #{tpu_custom_call.1} parent=11 // pred_fallthru
          _
        // Predicated region
        $region21: #{tpu_custom_call.1} parent=11 // pred_check
          %p215 = pneg %p105
        $region22: #{tpu_custom_call.1} parent=11 // pred_check_branch
          %217 = sbr.rel (%p215) target = $region24
        $region23: #{tpu_custom_call.1} parent=11 // pred_region
          _
        $region24: #{tpu_custom_call.1} parent=11 // pred_fallthru
          _
        // Predicated region
        $region25: #{tpu_custom_call.1} parent=11 // pred_check
          %p218 = pneg %p126
        $region26: #{tpu_custom_call.1} parent=11 // pred_check_branch
          %220 = sbr.rel (%p218) target = $region28
        $region27: #{tpu_custom_call.1} parent=11 // pred_region
          _
        $region28: #{tpu_custom_call.1} parent=11 // pred_fallthru
          _
        // Predicated region
        $region29: #{tpu_custom_call.1} parent=11 // pred_check
          %p221 = pneg %p147
        $region30: #{tpu_custom_call.1} parent=11 // pred_check_branch
          %223 = sbr.rel (%p221) target = $region32
        $region31: #{tpu_custom_call.1} parent=11 // pred_region
          _
        $region32: #{tpu_custom_call.1} parent=11 // pred_fallthru
          _
        // Predicated region
        $region33: #{tpu_custom_call.1} parent=11 // pred_check
          %p224 = pneg %p168
        $region34: #{tpu_custom_call.1} parent=11 // pred_check_branch
          %226 = sbr.rel (%p224) target = $region36
        $region35: #{tpu_custom_call.1} parent=11 // pred_region
          _
        $region36: #{tpu_custom_call.1} parent=11 // pred_fallthru
          _
      $region12: #{tpu_custom_call.1} parent=5 // pred_fallthru
        _
      %p227 = scmp.lt.s32.totalorder %s16, 2
      // Predicated region
      $region37: #{tpu_custom_call.1} parent=5 // pred_check
        %p228 = pneg %p227
      $region38: #{tpu_custom_call.1} parent=5 // pred_check_branch
        %230 = sbr.rel (%p228) target = $region40
      $region39: #{tpu_custom_call.1} parent=5 // pred_region
        // Predicated region
        $region41: #{tpu_custom_call.1} parent=39 // pred_check
          %p231 = pneg %p36
        $region42: #{tpu_custom_call.1} parent=39 // pred_check_branch
          %233 = sbr.rel (%p231) target = $region44
        $region43: #{tpu_custom_call.1} parent=39 // pred_region
          %s234 = smul.u32 16, %s16
          %p235 = scmp.lt.s32.totalorder %s234, 31
          %s236 = scalar_select %p235, %s234, 31
          %s237 = smul.addr %s236, 8
          %s238 = scalar_lea.vmem %s0, %s237
          %s239 = smul.u32 16, %s16
        $region44: #{tpu_custom_call.1} parent=39 // pred_fallthru
          _
      $region40: #{tpu_custom_call.1} parent=5 // pred_fallthru
        _
      %p240 = scmp.le.s32.totalorder 1, %s16
      %p241 = scmp.lt.s32.totalorder %s16, 3
      %p242 = pnand %p240, %p241
      %p243 = pneg %p242
      // Predicated region
      $region45: #{tpu_custom_call.1} parent=5 // pred_check
        _
      $region46: #{tpu_custom_call.1} parent=5 // pred_check_branch
        %245 = sbr.rel (%p242) target = $region48
      $region47: #{tpu_custom_call.1} parent=5 // pred_region
        %s246 = ssub.s32 %s16, 1
        %s247 = smul.u32 16, %s21
        %p248 = scmp.lt.s32.totalorder %s247, 31
        %s249 = scalar_select %p248, %s247, 31
        %s250 = smul.addr %s249, 8
        %s251 = scalar_lea.vmem %s0, %s250
        %p252 = pneg %p42
        %p253 = pneg %p39
        %p254 = pneg %p63
        %p255 = pneg %p60
        %p256 = pneg %p84
        %p257 = pneg %p81
        %p258 = pneg %p105
        %p259 = pneg %p102
        %p260 = pneg %p126
        %p261 = pneg %p123
        %p262 = pneg %p147
        %p263 = pneg %p144
        %p264 = pneg %p168
        %p265 = pneg %p165
        %p266 = pneg %p194
        %p267 = pneg %p191
        %s268 = sand.u32 %s181, 1
        %s269 = scalar_lea.sflag [#allocation3], %s268
        %s270 = sand.u32 %s181, 1
        %s271 = smul.addr %s270, 128
        %s272 = scalar_lea.vmem [#allocation2], %s271
        %s273 = smul.u32 16, %s21
        %p274 = scmp.lt.s32.totalorder %s273, 31
        %s275 = scalar_select %p274, %s273, 31
        %s276 = smul.addr %s275, 8
        %s277 = scalar_lea.vmem %s0, %s276
        %s278 = smul.u32 16, %s21
        %s279 = smul.u32 16, %s21
        %v281 = vld [vmem:[%s277] sm:$0xff]
        %v282 = vld [vmem:[%s277 + $0x8] sm:$0xff]
        %v283 = vld [vmem:[%s277 + $0x10] sm:$0xff]
        %v284 = vld [vmem:[%s277 + $0x18] sm:$0xff]
        %v285 = vld [vmem:[%s277 + $0x20] sm:$0xff]
        %v286 = vld [vmem:[%s277 + $0x28] sm:$0xff]
        %v287 = vld [vmem:[%s277 + $0x30] sm:$0xff]
        %v288 = vld [vmem:[%s277 + $0x38] sm:$0xff]
        %v289 = vld [vmem:[%s277 + $0x40] sm:$0xff]
        %v290 = vld [vmem:[%s277 + $0x48] sm:$0xff]
        %v291 = vld [vmem:[%s277 + $0x50] sm:$0xff]
        %v292 = vld [vmem:[%s277 + $0x58] sm:$0xff]
        %v293 = vld [vmem:[%s277 + $0x60] sm:$0xff]
        %v294 = vld [vmem:[%s277 + $0x68] sm:$0xff]
        %v295 = vld [vmem:[%s277 + $0x70] sm:$0xff]
        %v296 = vld [vmem:[%s277 + $0x78] sm:$0xff]
        %v297 = vpack.c.bf16 %v282, %v281
        %v298 = vpack.c.bf16 %v284, %v283
        %v299 = vpack.c.bf16 %v286, %v285
        %v300 = vpack.c.bf16 %v288, %v287
        %v301 = vpack.c.bf16 %v290, %v289
        %v302 = vpack.c.bf16 %v292, %v291
        %v303 = vpack.c.bf16 %v294, %v293
        %v304 = vpack.c.bf16 %v296, %v295
        %v305 = vld [vmem:[%s1] sm:$0xf]
        %v306 = vld [vmem:[%s1 + $0x4] sm:$0xf]
        %v307 = vld [vmem:[%s2] sm:$0x1]
        %v309 = vlaneseq
        %v310 = vshrl.u32 %v309, 7
        %v311 = vsub.s32 0, %v310
        %v312 = vrot.slane %v307, %v311
        %v316 = vunpack.c.l.b16 %v305
        %v317 = vunpack.c.l.b16 %v306
        %v318 = vpack.c.b16 %v317, %v316
        %vm320 = vcmask 130048
        %v322 = vsel %vm320, %v297, 0
        %v325 = vsel %vm320, %v298, 0
        %v328 = vsel %vm320, %v299, 0
        %v331 = vsel %vm320, %v300, 0
        %v334 = vsel %vm320, %v301, 0
        %v337 = vsel %vm320, %v302, 0
        %v340 = vsel %vm320, %v303, 0
        %v343 = vsel %vm320, %v304, 0
        %345 = vmatprep.subr.bf16.mxu0 0
        %346 = vmatpush1.bf16.msra.mxu0 %v318
        %347 = vmatprep.subr.bf16.mxu0 0
        %348 = vmatpush1.bf16.msra.mxu0 0
        %349 = vmatprep.subr.bf16.mxu0 0
        %350 = vmatpush1.bf16.msra.mxu0 0
        %351 = vmatprep.subr.bf16.mxu0 0
        %352 = vmatpush1.bf16.msra.mxu0 0
        %353 = vmatprep.subr.bf16.mxu0 0
        %354 = vmatpush1.bf16.msra.mxu0 0
        %355 = vmatprep.subr.bf16.mxu0 0
        %356 = vmatpush1.bf16.msra.mxu0 0
        %357 = vmatprep.subr.bf16.mxu0 0
        %358 = vmatpush1.bf16.msra.mxu0 0
        %359 = vmatprep.subr.bf16.mxu0 0
        %360 = vmatpush1.bf16.msra.mxu0 0
        %361 = vmatprep.subr.bf16.mxu0 0
        %362 = vmatpush1.bf16.msra.mxu0 0
        %363 = vmatprep.subr.bf16.mxu0 0
        %364 = vmatpush1.bf16.msra.mxu0 0
        %365 = vmatprep.subr.bf16.mxu0 0
        %366 = vmatpush1.bf16.msra.mxu0 0
        %367 = vmatprep.subr.bf16.mxu0 0
        %368 = vmatpush1.bf16.msra.mxu0 0
        %369 = vmatprep.subr.bf16.mxu0 0
        %370 = vmatpush1.bf16.msra.mxu0 0
        %371 = vmatprep.subr.bf16.mxu0 0
        %372 = vmatpush1.bf16.msra.mxu0 0
        %373 = vmatprep.subr.bf16.mxu0 0
        %374 = vmatpush1.bf16.msra.mxu0 0
        %375 = vmatprep.subr.bf16.mxu0 0
        %376 = vmatpush1.bf16.msra.mxu0 0
        %377 = vmatprep.mubr.bf16.mxu0 0
        %378 = vmatmul.mubr.bf16.gmra.mrb[0].mxu0 %v322
        %v379 = vpop.f32.mrb[0].mxu0
        %v380 = vadd.f32 %v312, %v379
        %v381 = vpop.f32.mrb[0].mxu0
        %v382 = vpop.f32.mrb[0].mxu0
        %v383 = vadd.f32 %v312, %v382
        %v384 = vpop.f32.mrb[0].mxu0
        %385 = vmatprep.mubr.bf16.mxu0 0
        %386 = vmatmul.mubr.bf16.gmra.mrb[0].mxu0 %v325
        %v387 = vpop.f32.mrb[0].mxu0
        %v388 = vadd.f32 %v312, %v387
        %v389 = vpop.f32.mrb[0].mxu0
        %v390 = vpop.f32.mrb[0].mxu0
        %v391 = vadd.f32 %v312, %v390
        %v392 = vpop.f32.mrb[0].mxu0
        %393 = vmatprep.mubr.bf16.mxu0 0
        %394 = vmatmul.mubr.bf16.gmra.mrb[0].mxu0 %v328
        %v395 = vpop.f32.mrb[0].mxu0
        %v396 = vadd.f32 %v312, %v395
        %v397 = vpop.f32.mrb[0].mxu0
        %v398 = vpop.f32.mrb[0].mxu0
        %v399 = vadd.f32 %v312, %v398
        %v400 = vpop.f32.mrb[0].mxu0
        %401 = vmatprep.mubr.bf16.mxu0 0
        %402 = vmatmul.mubr.bf16.gmra.mrb[0].mxu0 %v331
        %v403 = vpop.f32.mrb[0].mxu0
        %v404 = vadd.f32 %v312, %v403
        %v405 = vpop.f32.mrb[0].mxu0
        %v406 = vpop.f32.mrb[0].mxu0
        %v407 = vadd.f32 %v312, %v406
        %v408 = vpop.f32.mrb[0].mxu0
        %409 = vmatprep.mubr.bf16.mxu0 0
        %410 = vmatmul.mubr.bf16.gmra.mrb[0].mxu0 %v334
        %v411 = vpop.f32.mrb[0].mxu0
        %v412 = vadd.f32 %v312, %v411
        %v413 = vpop.f32.mrb[0].mxu0
        %v414 = vpop.f32.mrb[0].mxu0
        %v415 = vadd.f32 %v312, %v414
        %v416 = vpop.f32.mrb[0].mxu0
        %417 = vmatprep.mubr.bf16.mxu0 0
        %418 = vmatmul.mubr.bf16.gmra.mrb[0].mxu0 %v337
        %v419 = vpop.f32.mrb[0].mxu0
        %v420 = vadd.f32 %v312, %v419
        %v421 = vpop.f32.mrb[0].mxu0
        %v422 = vpop.f32.mrb[0].mxu0
        %v423 = vadd.f32 %v312, %v422
        %v424 = vpop.f32.mrb[0].mxu0
        %425 = vmatprep.mubr.bf16.mxu0 0
        %426 = vmatmul.mubr.bf16.gmra.mrb[0].mxu0 %v340
        %v427 = vpop.f32.mrb[0].mxu0
        %v428 = vadd.f32 %v312, %v427
        %v429 = vpop.f32.mrb[0].mxu0
        %v430 = vpop.f32.mrb[0].mxu0
        %v431 = vadd.f32 %v312, %v430
        %v432 = vpop.f32.mrb[0].mxu0
        %433 = vmatprep.mubr.bf16.mxu0 0
        %434 = vmatmul.mubr.bf16.gmra.mrb[0].mxu0 %v343
        %v435 = vpop.f32.mrb[0].mxu0
        %v436 = vadd.f32 %v312, %v435
        %v437 = vpop.f32.mrb[0].mxu0
        %v438 = vpop.f32.mrb[0].mxu0
        %v439 = vadd.f32 %v312, %v438
        %v440 = vpop.f32.mrb[0].mxu0
        %441 = vdwg.mxu0
        %v442 = vmax.f32 %v380, 0.0
        %v443 = vmax.f32 %v383, 0.0
        %v444 = vmax.f32 %v388, 0.0
        %v445 = vmax.f32 %v391, 0.0
        %v446 = vmax.f32 %v396, 0.0
        %v447 = vmax.f32 %v399, 0.0
        %v448 = vmax.f32 %v404, 0.0
        %v449 = vmax.f32 %v407, 0.0
        %v450 = vmax.f32 %v412, 0.0
        %v451 = vmax.f32 %v415, 0.0
        %v452 = vmax.f32 %v420, 0.0
        %v453 = vmax.f32 %v423, 0.0
        %v454 = vmax.f32 %v428, 0.0
        %v455 = vmax.f32 %v431, 0.0
        %v456 = vmax.f32 %v436, 0.0
        %v457 = vmax.f32 %v439, 0.0
        %v458 = vpack.c.bf16 %v443, %v442
        %v459 = vpack.c.bf16 %v445, %v444
        %v460 = vpack.c.bf16 %v447, %v446
        %v461 = vpack.c.bf16 %v449, %v448
        %v462 = vpack.c.bf16 %v451, %v450
        %v463 = vpack.c.bf16 %v453, %v452
        %v464 = vpack.c.bf16 %v455, %v454
        %v465 = vpack.c.bf16 %v457, %v456
        %v466 = vld [vmem:[%s3] sm:$0xf]
        %v467 = vld [vmem:[%s3 + $0x4] sm:$0xf]
        %v468 = vld [vmem:[%s3 + $0x8] sm:$0xf]
        %v469 = vld [vmem:[%s3 + $0xc] sm:$0xf]
        %v470 = vld [vmem:[%s3 + $0x10] sm:$0xf]
        %v471 = vld [vmem:[%s3 + $0x14] sm:$0xf]
        %v472 = vld [vmem:[%s3 + $0x18] sm:$0xf]
        %v473 = vld [vmem:[%s3 + $0x1c] sm:$0xf]
        %v474 = vld [vmem:[%s3 + $0x20] sm:$0xf]
        %v475 = vld [vmem:[%s3 + $0x24] sm:$0xf]
        %v476 = vld [vmem:[%s3 + $0x28] sm:$0xf]
        %v477 = vld [vmem:[%s3 + $0x2c] sm:$0xf]
        %v478 = vld [vmem:[%s3 + $0x30] sm:$0xf]
        %v479 = vld [vmem:[%s3 + $0x34] sm:$0xf]
        %v480 = vld [vmem:[%s3 + $0x38] sm:$0xf]
        %v481 = vld [vmem:[%s3 + $0x3c] sm:$0xf]
        %v482 = vld [vmem:[%s4] sm:$0x1]
        %v484 = vlaneseq
        %v485 = vshrl.u32 %v484, 7
        %v486 = vsub.s32 0, %v485
        %v487 = vrot.slane %v482, %v486
        %v505 = vunpack.c.l.b16 %v466
        %v506 = vunpack.c.l.b16 %v467
        %v507 = vunpack.c.l.b16 %v468
        %v508 = vunpack.c.l.b16 %v469
        %v509 = vunpack.c.l.b16 %v470
        %v510 = vunpack.c.l.b16 %v471
        %v511 = vunpack.c.l.b16 %v472
        %v512 = vunpack.c.l.b16 %v473
        %v513 = vunpack.c.l.b16 %v474
        %v514 = vunpack.c.l.b16 %v475
        %v515 = vunpack.c.l.b16 %v476
        %v516 = vunpack.c.l.b16 %v477
        %v517 = vunpack.c.l.b16 %v478
        %v518 = vunpack.c.l.b16 %v479
        %v519 = vunpack.c.l.b16 %v480
        %v520 = vunpack.c.l.b16 %v481
        %v521 = vpack.c.b16 %v506, %v505
        %v522 = vpack.c.b16 %v508, %v507
        %v523 = vpack.c.b16 %v510, %v509
        %v524 = vpack.c.b16 %v512, %v511
        %v525 = vpack.c.b16 %v514, %v513
        %v526 = vpack.c.b16 %v516, %v515
        %v527 = vpack.c.b16 %v518, %v517
        %v528 = vpack.c.b16 %v520, %v519
        %537 = vmatprep.subr.bf16.mxu0 0
        %538 = vmatpush1.bf16.msra.mxu0 %v521
        %539 = vmatprep.subr.bf16.mxu0 0
        %540 = vmatpush1.bf16.msra.mxu0 %v522
        %541 = vmatprep.subr.bf16.mxu0 0
        %542 = vmatpush1.bf16.msra.mxu0 %v523
        %543 = vmatprep.subr.bf16.mxu0 0
        %544 = vmatpush1.bf16.msra.mxu0 %v524
        %545 = vmatprep.subr.bf16.mxu0 0
        %546 = vmatpush1.bf16.msra.mxu0 %v525
        %547 = vmatprep.subr.bf16.mxu0 0
        %548 = vmatpush1.bf16.msra.mxu0 %v526
        %549 = vmatprep.subr.bf16.mxu0 0
        %550 = vmatpush1.bf16.msra.mxu0 %v527
        %551 = vmatprep.subr.bf16.mxu0 0
        %552 = vmatpush1.bf16.msra.mxu0 %v528
        %553 = vmatprep.subr.bf16.mxu0 0
        %554 = vmatpush1.bf16.msra.mxu0 0
        %555 = vmatprep.subr.bf16.mxu0 0
        %556 = vmatpush1.bf16.msra.mxu0 0
        %557 = vmatprep.subr.bf16.mxu0 0
        %558 = vmatpush1.bf16.msra.mxu0 0
        %559 = vmatprep.subr.bf16.mxu0 0
        %560 = vmatpush1.bf16.msra.mxu0 0
        %561 = vmatprep.subr.bf16.mxu0 0
        %562 = vmatpush1.bf16.msra.mxu0 0
        %563 = vmatprep.subr.bf16.mxu0 0
        %564 = vmatpush1.bf16.msra.mxu0 0
        %565 = vmatprep.subr.bf16.mxu0 0
        %566 = vmatpush1.bf16.msra.mxu0 0
        %567 = vmatprep.subr.bf16.mxu0 0
        %568 = vmatpush1.bf16.msra.mxu0 0
        %569 = vmatprep.mubr.bf16.mxu0 0
        %570 = vmatmul.mubr.bf16.gmra.mrb[0].mxu0 %v458
        %v571 = vpop.f32.mrb[0].mxu0
        %v572 = vadd.f32 %v487, %v571
        %v573 = vpop.f32.mrb[0].mxu0
        %v574 = vpop.f32.mrb[0].mxu0
        %v575 = vadd.f32 %v487, %v574
        %v576 = vpop.f32.mrb[0].mxu0
        %577 = vmatprep.mubr.bf16.mxu0 0
        %578 = vmatmul.mubr.bf16.gmra.mrb[0].mxu0 %v459
        %v579 = vpop.f32.mrb[0].mxu0
        %v580 = vadd.f32 %v487, %v579
        %v581 = vpop.f32.mrb[0].mxu0
        %v582 = vpop.f32.mrb[0].mxu0
        %v583 = vadd.f32 %v487, %v582
        %v584 = vpop.f32.mrb[0].mxu0
        %585 = vmatprep.mubr.bf16.mxu0 0
        %586 = vmatmul.mubr.bf16.gmra.mrb[0].mxu0 %v460
        %v587 = vpop.f32.mrb[0].mxu0
        %v588 = vadd.f32 %v487, %v587
        %v589 = vpop.f32.mrb[0].mxu0
        %v590 = vpop.f32.mrb[0].mxu0
        %v591 = vadd.f32 %v487, %v590
        %v592 = vpop.f32.mrb[0].mxu0
        %593 = vmatprep.mubr.bf16.mxu0 0
        %594 = vmatmul.mubr.bf16.gmra.mrb[0].mxu0 %v461
        %v595 = vpop.f32.mrb[0].mxu0
        %v596 = vadd.f32 %v487, %v595
        %v597 = vpop.f32.mrb[0].mxu0
        %v598 = vpop.f32.mrb[0].mxu0
        %v599 = vadd.f32 %v487, %v598
        %v600 = vpop.f32.mrb[0].mxu0
        %601 = vmatprep.mubr.bf16.mxu0 0
        %602 = vmatmul.mubr.bf16.gmra.mrb[0].mxu0 %v462
        %v603 = vpop.f32.mrb[0].mxu0
        %v604 = vadd.f32 %v487, %v603
        %v605 = vpop.f32.mrb[0].mxu0
        %v606 = vpop.f32.mrb[0].mxu0
        %v607 = vadd.f32 %v487, %v606
        %v608 = vpop.f32.mrb[0].mxu0
        %609 = vmatprep.mubr.bf16.mxu0 0
        %610 = vmatmul.mubr.bf16.gmra.mrb[0].mxu0 %v463
        %v611 = vpop.f32.mrb[0].mxu0
        %v612 = vadd.f32 %v487, %v611
        %v613 = vpop.f32.mrb[0].mxu0
        %v614 = vpop.f32.mrb[0].mxu0
        %v615 = vadd.f32 %v487, %v614
        %v616 = vpop.f32.mrb[0].mxu0
        %617 = vmatprep.mubr.bf16.mxu0 0
        %618 = vmatmul.mubr.bf16.gmra.mrb[0].mxu0 %v464
        %v619 = vpop.f32.mrb[0].mxu0
        %v620 = vadd.f32 %v487, %v619
        %v621 = vpop.f32.mrb[0].mxu0
        %v622 = vpop.f32.mrb[0].mxu0
        %v623 = vadd.f32 %v487, %v622
        %v624 = vpop.f32.mrb[0].mxu0
        %625 = vmatprep.mubr.bf16.mxu0 0
        %626 = vmatmul.mubr.bf16.gmra.mrb[0].mxu0 %v465
        %v627 = vpop.f32.mrb[0].mxu0
        %v628 = vadd.f32 %v487, %v627
        %v629 = vpop.f32.mrb[0].mxu0
        %v630 = vpop.f32.mrb[0].mxu0
        %v631 = vadd.f32 %v487, %v630
        %v632 = vpop.f32.mrb[0].mxu0
        %633 = vdwg.mxu0
        %v634 = vmax.f32 %v572, 0.0
        %v635 = vmax.f32 %v575, 0.0
        %v636 = vmax.f32 %v580, 0.0
        %v637 = vmax.f32 %v583, 0.0
        %v638 = vmax.f32 %v588, 0.0
        %v639 = vmax.f32 %v591, 0.0
        %v640 = vmax.f32 %v596, 0.0
        %v641 = vmax.f32 %v599, 0.0
        %v642 = vmax.f32 %v604, 0.0
        %v643 = vmax.f32 %v607, 0.0
        %v644 = vmax.f32 %v612, 0.0
        %v645 = vmax.f32 %v615, 0.0
        %v646 = vmax.f32 %v620, 0.0
        %v647 = vmax.f32 %v623, 0.0
        %v648 = vmax.f32 %v628, 0.0
        %v649 = vmax.f32 %v631, 0.0
        %v650 = vpack.c.bf16 %v635, %v634
        %v651 = vpack.c.bf16 %v637, %v636
        %v652 = vpack.c.bf16 %v639, %v638
        %v653 = vpack.c.bf16 %v641, %v640
        %v654 = vpack.c.bf16 %v643, %v642
        %v655 = vpack.c.bf16 %v645, %v644
        %v656 = vpack.c.bf16 %v647, %v646
        %v657 = vpack.c.bf16 %v649, %v648
        %v658 = vld [vmem:[%s5] sm:$0xf]
        %v659 = vld [vmem:[%s5 + $0x4] sm:$0xf]
        %v660 = vld [vmem:[%s5 + $0x8] sm:$0xf]
        %v661 = vld [vmem:[%s5 + $0xc] sm:$0xf]
        %v662 = vld [vmem:[%s5 + $0x10] sm:$0xf]
        %v663 = vld [vmem:[%s5 + $0x14] sm:$0xf]
        %v664 = vld [vmem:[%s5 + $0x18] sm:$0xf]
        %v665 = vld [vmem:[%s5 + $0x1c] sm:$0xf]
        %v666 = vld [vmem:[%s5 + $0x20] sm:$0xf]
        %v667 = vld [vmem:[%s5 + $0x24] sm:$0xf]
        %v668 = vld [vmem:[%s5 + $0x28] sm:$0xf]
        %v669 = vld [vmem:[%s5 + $0x2c] sm:$0xf]
        %v670 = vld [vmem:[%s5 + $0x30] sm:$0xf]
        %v671 = vld [vmem:[%s5 + $0x34] sm:$0xf]
        %v672 = vld [vmem:[%s5 + $0x38] sm:$0xf]
        %v673 = vld [vmem:[%s5 + $0x3c] sm:$0xf]
        %v674 = vld [vmem:[%s6] sm:$0x1]
        %v676 = vlaneseq
        %v677 = vshrl.u32 %v676, 7
        %v678 = vsub.s32 0, %v677
        %v679 = vrot.slane %v674, %v678
        %v697 = vunpack.c.l.b16 %v658
        %v698 = vunpack.c.l.b16 %v659
        %v699 = vunpack.c.l.b16 %v660
        %v700 = vunpack.c.l.b16 %v661
        %v701 = vunpack.c.l.b16 %v662
        %v702 = vunpack.c.l.b16 %v663
        %v703 = vunpack.c.l.b16 %v664
        %v704 = vunpack.c.l.b16 %v665
        %v705 = vunpack.c.l.b16 %v666
        %v706 = vunpack.c.l.b16 %v667
        %v707 = vunpack.c.l.b16 %v668
        %v708 = vunpack.c.l.b16 %v669
        %v709 = vunpack.c.l.b16 %v670
        %v710 = vunpack.c.l.b16 %v671
        %v711 = vunpack.c.l.b16 %v672
        %v712 = vunpack.c.l.b16 %v673
        %v713 = vpack.c.b16 %v698, %v697
        %v714 = vpack.c.b16 %v700, %v699
        %v715 = vpack.c.b16 %v702, %v701
        %v716 = vpack.c.b16 %v704, %v703
        %v717 = vpack.c.b16 %v706, %v705
        %v718 = vpack.c.b16 %v708, %v707
        %v719 = vpack.c.b16 %v710, %v709
        %v720 = vpack.c.b16 %v712, %v711
        %729 = vmatprep.subr.bf16.mxu0 0
        %730 = vmatpush1.bf16.msra.mxu0 %v713
        %731 = vmatprep.subr.bf16.mxu0 0
        %732 = vmatpush1.bf16.msra.mxu0 %v714
        %733 = vmatprep.subr.bf16.mxu0 0
        %734 = vmatpush1.bf16.msra.mxu0 %v715
        %735 = vmatprep.subr.bf16.mxu0 0
        %736 = vmatpush1.bf16.msra.mxu0 %v716
        %737 = vmatprep.subr.bf16.mxu0 0
        %738 = vmatpush1.bf16.msra.mxu0 %v717
        %739 = vmatprep.subr.bf16.mxu0 0
        %740 = vmatpush1.bf16.msra.mxu0 %v718
        %741 = vmatprep.subr.bf16.mxu0 0
        %742 = vmatpush1.bf16.msra.mxu0 %v719
        %743 = vmatprep.subr.bf16.mxu0 0
        %744 = vmatpush1.bf16.msra.mxu0 %v720
        %745 = vmatprep.subr.bf16.mxu0 0
        %746 = vmatpush1.bf16.msra.mxu0 0
        %747 = vmatprep.subr.bf16.mxu0 0
        %748 = vmatpush1.bf16.msra.mxu0 0
        %749 = vmatprep.subr.bf16.mxu0 0
        %750 = vmatpush1.bf16.msra.mxu0 0
        %751 = vmatprep.subr.bf16.mxu0 0
        %752 = vmatpush1.bf16.msra.mxu0 0
        %753 = vmatprep.subr.bf16.mxu0 0
        %754 = vmatpush1.bf16.msra.mxu0 0
        %755 = vmatprep.subr.bf16.mxu0 0
        %756 = vmatpush1.bf16.msra.mxu0 0
        %757 = vmatprep.subr.bf16.mxu0 0
        %758 = vmatpush1.bf16.msra.mxu0 0
        %759 = vmatprep.subr.bf16.mxu0 0
        %760 = vmatpush1.bf16.msra.mxu0 0
        %761 = vmatprep.mubr.bf16.mxu0 0
        %762 = vmatmul.mubr.bf16.gmra.mrb[0].mxu0 %v650
        %v763 = vpop.f32.mrb[0].mxu0
        %v764 = vadd.f32 %v679, %v763
        %v765 = vpop.f32.mrb[0].mxu0
        %v766 = vpop.f32.mrb[0].mxu0
        %v767 = vadd.f32 %v679, %v766
        %v768 = vpop.f32.mrb[0].mxu0
        %769 = vmatprep.mubr.bf16.mxu0 0
        %770 = vmatmul.mubr.bf16.gmra.mrb[0].mxu0 %v651
        %v771 = vpop.f32.mrb[0].mxu0
        %v772 = vadd.f32 %v679, %v771
        %v773 = vpop.f32.mrb[0].mxu0
        %v774 = vpop.f32.mrb[0].mxu0
        %v775 = vadd.f32 %v679, %v774
        %v776 = vpop.f32.mrb[0].mxu0
        %777 = vmatprep.mubr.bf16.mxu0 0
        %778 = vmatmul.mubr.bf16.gmra.mrb[0].mxu0 %v652
        %v779 = vpop.f32.mrb[0].mxu0
        %v780 = vadd.f32 %v679, %v779
        %v781 = vpop.f32.mrb[0].mxu0
        %v782 = vpop.f32.mrb[0].mxu0
        %v783 = vadd.f32 %v679, %v782
        %v784 = vpop.f32.mrb[0].mxu0
        %785 = vmatprep.mubr.bf16.mxu0 0
        %786 = vmatmul.mubr.bf16.gmra.mrb[0].mxu0 %v653
        %v787 = vpop.f32.mrb[0].mxu0
        %v788 = vadd.f32 %v679, %v787
        %v789 = vpop.f32.mrb[0].mxu0
        %v790 = vpop.f32.mrb[0].mxu0
        %v791 = vadd.f32 %v679, %v790
        %v792 = vpop.f32.mrb[0].mxu0
        %793 = vmatprep.mubr.bf16.mxu0 0
        %794 = vmatmul.mubr.bf16.gmra.mrb[0].mxu0 %v654
        %v795 = vpop.f32.mrb[0].mxu0
        %v796 = vadd.f32 %v679, %v795
        %v797 = vpop.f32.mrb[0].mxu0
        %v798 = vpop.f32.mrb[0].mxu0
        %v799 = vadd.f32 %v679, %v798
        %v800 = vpop.f32.mrb[0].mxu0
        %801 = vmatprep.mubr.bf16.mxu0 0
        %802 = vmatmul.mubr.bf16.gmra.mrb[0].mxu0 %v655
        %v803 = vpop.f32.mrb[0].mxu0
        %v804 = vadd.f32 %v679, %v803
        %v805 = vpop.f32.mrb[0].mxu0
        %v806 = vpop.f32.mrb[0].mxu0
        %v807 = vadd.f32 %v679, %v806
        %v808 = vpop.f32.mrb[0].mxu0
        %809 = vmatprep.mubr.bf16.mxu0 0
        %810 = vmatmul.mubr.bf16.gmra.mrb[0].mxu0 %v656
        %v811 = vpop.f32.mrb[0].mxu0
        %v812 = vadd.f32 %v679, %v811
        %v813 = vpop.f32.mrb[0].mxu0
        %v814 = vpop.f32.mrb[0].mxu0
        %v815 = vadd.f32 %v679, %v814
        %v816 = vpop.f32.mrb[0].mxu0
        %817 = vmatprep.mubr.bf16.mxu0 0
        %818 = vmatmul.mubr.bf16.gmra.mrb[0].mxu0 %v657
        %v819 = vpop.f32.mrb[0].mxu0
        %v820 = vadd.f32 %v679, %v819
        %v821 = vpop.f32.mrb[0].mxu0
        %v822 = vpop.f32.mrb[0].mxu0
        %v823 = vadd.f32 %v679, %v822
        %v824 = vpop.f32.mrb[0].mxu0
        %825 = vdwg.mxu0
        %826 = vmax.xlane.f32.xlu0 %v764
        %v827 = vpop.xlane.xlu0 %826
        %828 = vmax.xlane.f32.xlu0 %v767
        %v829 = vpop.xlane.xlu0 %828
        %830 = vmax.xlane.f32.xlu0 %v772
        %v831 = vpop.xlane.xlu0 %830
        %832 = vmax.xlane.f32.xlu0 %v775
        %v833 = vpop.xlane.xlu0 %832
        %834 = vmax.xlane.f32.xlu0 %v780
        %v835 = vpop.xlane.xlu0 %834
        %836 = vmax.xlane.f32.xlu0 %v783
        %v837 = vpop.xlane.xlu0 %836
        %838 = vmax.xlane.f32.xlu0 %v788
        %v839 = vpop.xlane.xlu0 %838
        %840 = vmax.xlane.f32.xlu0 %v791
        %v841 = vpop.xlane.xlu0 %840
        %842 = vmax.xlane.f32.xlu0 %v796
        %v843 = vpop.xlane.xlu0 %842
        %844 = vmax.xlane.f32.xlu0 %v799
        %v845 = vpop.xlane.xlu0 %844
        %846 = vmax.xlane.f32.xlu0 %v804
        %v847 = vpop.xlane.xlu0 %846
        %848 = vmax.xlane.f32.xlu0 %v807
        %v849 = vpop.xlane.xlu0 %848
        %850 = vmax.xlane.f32.xlu0 %v812
        %v851 = vpop.xlane.xlu0 %850
        %852 = vmax.xlane.f32.xlu0 %v815
        %v853 = vpop.xlane.xlu0 %852
        %854 = vmax.xlane.f32.xlu0 %v820
        %v855 = vpop.xlane.xlu0 %854
        %856 = vmax.xlane.f32.xlu0 %v823
        %v857 = vpop.xlane.xlu0 %856
        %v858 = vsub.f32 %v764, %v827
        %v859 = vsub.f32 %v767, %v829
        %v860 = vsub.f32 %v772, %v831
        %v861 = vsub.f32 %v775, %v833
        %v862 = vsub.f32 %v780, %v835
        %v863 = vsub.f32 %v783, %v837
        %v864 = vsub.f32 %v788, %v839
        %v865 = vsub.f32 %v791, %v841
        %v866 = vsub.f32 %v796, %v843
        %v867 = vsub.f32 %v799, %v845
        %v868 = vsub.f32 %v804, %v847
        %v869 = vsub.f32 %v807, %v849
        %v870 = vsub.f32 %v812, %v851
        %v871 = vsub.f32 %v815, %v853
        %v872 = vsub.f32 %v820, %v855
        %v873 = vsub.f32 %v823, %v857
        %v874 = vmul.f32 %v858, 1.442695
        %v875 = vpow.pop %v874
        %v876 = vmul.f32 %v859, 1.442695
        %v877 = vpow.pop %v876
        %v878 = vmul.f32 %v860, 1.442695
        %v879 = vpow.pop %v878
        %v880 = vmul.f32 %v861, 1.442695
        %v881 = vpow.pop %v880
        %v882 = vmul.f32 %v862, 1.442695
        %v883 = vpow.pop %v882
        %v884 = vmul.f32 %v863, 1.442695
        %v885 = vpow.pop %v884
        %v886 = vmul.f32 %v864, 1.442695
        %v887 = vpow.pop %v886
        %v888 = vmul.f32 %v865, 1.442695
        %v889 = vpow.pop %v888
        %v890 = vmul.f32 %v866, 1.442695
        %v891 = vpow.pop %v890
        %v892 = vmul.f32 %v867, 1.442695
        %v893 = vpow.pop %v892
        %v894 = vmul.f32 %v868, 1.442695
        %v895 = vpow.pop %v894
        %v896 = vmul.f32 %v869, 1.442695
        %v897 = vpow.pop %v896
        %v898 = vmul.f32 %v870, 1.442695
        %v899 = vpow.pop %v898
        %v900 = vmul.f32 %v871, 1.442695
        %v901 = vpow.pop %v900
        %v902 = vmul.f32 %v872, 1.442695
        %v903 = vpow.pop %v902
        %v904 = vmul.f32 %v873, 1.442695
        %v905 = vpow.pop %v904
        %906 = vadd.xlane.f32.xlu0 %v875
        %v907 = vpop.xlane.xlu0 %906
        %908 = vadd.xlane.f32.xlu0 %v877
        %v909 = vpop.xlane.xlu0 %908
        %910 = vadd.xlane.f32.xlu0 %v879
        %v911 = vpop.xlane.xlu0 %910
        %912 = vadd.xlane.f32.xlu0 %v881
        %v913 = vpop.xlane.xlu0 %912
        %914 = vadd.xlane.f32.xlu0 %v883
        %v915 = vpop.xlane.xlu0 %914
        %916 = vadd.xlane.f32.xlu0 %v885
        %v917 = vpop.xlane.xlu0 %916
        %918 = vadd.xlane.f32.xlu0 %v887
        %v919 = vpop.xlane.xlu0 %918
        %920 = vadd.xlane.f32.xlu0 %v889
        %v921 = vpop.xlane.xlu0 %920
        %922 = vadd.xlane.f32.xlu0 %v891
        %v923 = vpop.xlane.xlu0 %922
        %924 = vadd.xlane.f32.xlu0 %v893
        %v925 = vpop.xlane.xlu0 %924
        %926 = vadd.xlane.f32.xlu0 %v895
        %v927 = vpop.xlane.xlu0 %926
        %928 = vadd.xlane.f32.xlu0 %v897
        %v929 = vpop.xlane.xlu0 %928
        %930 = vadd.xlane.f32.xlu0 %v899
        %v931 = vpop.xlane.xlu0 %930
        %932 = vadd.xlane.f32.xlu0 %v901
        %v933 = vpop.xlane.xlu0 %932
        %934 = vadd.xlane.f32.xlu0 %v903
        %v935 = vpop.xlane.xlu0 %934
        %936 = vadd.xlane.f32.xlu0 %v905
        %v937 = vpop.xlane.xlu0 %936
        %v938 = vrcp.pop %v907
        %v939 = vmul.f32 %v875, %v938
        %v940 = vrcp.pop %v909
        %v941 = vmul.f32 %v877, %v940
        %v942 = vrcp.pop %v911
        %v943 = vmul.f32 %v879, %v942
        %v944 = vrcp.pop %v913
        %v945 = vmul.f32 %v881, %v944
        %v946 = vrcp.pop %v915
        %v947 = vmul.f32 %v883, %v946
        %v948 = vrcp.pop %v917
        %v949 = vmul.f32 %v885, %v948
        %v950 = vrcp.pop %v919
        %v951 = vmul.f32 %v887, %v950
        %v952 = vrcp.pop %v921
        %v953 = vmul.f32 %v889, %v952
        %v954 = vrcp.pop %v923
        %v955 = vmul.f32 %v891, %v954
        %v956 = vrcp.pop %v925
        %v957 = vmul.f32 %v893, %v956
        %v958 = vrcp.pop %v927
        %v959 = vmul.f32 %v895, %v958
        %v960 = vrcp.pop %v929
        %v961 = vmul.f32 %v897, %v960
        %v962 = vrcp.pop %v931
        %v963 = vmul.f32 %v899, %v962
        %v964 = vrcp.pop %v933
        %v965 = vmul.f32 %v901, %v964
        %v966 = vrcp.pop %v935
        %v967 = vmul.f32 %v903, %v966
        %v968 = vrcp.pop %v937
        %v969 = vmul.f32 %v905, %v968
        %970 = vst [vmem:[%s272] sm:$0xff] %v939
        %971 = vst [vmem:[%s272 + $0x8] sm:$0xff] %v941
        %972 = vst [vmem:[%s272 + $0x10] sm:$0xff] %v943
        %973 = vst [vmem:[%s272 + $0x18] sm:$0xff] %v945
        %974 = vst [vmem:[%s272 + $0x20] sm:$0xff] %v947
        %975 = vst [vmem:[%s272 + $0x28] sm:$0xff] %v949
        %976 = vst [vmem:[%s272 + $0x30] sm:$0xff] %v951
        %977 = vst [vmem:[%s272 + $0x38] sm:$0xff] %v953
        %978 = vst [vmem:[%s272 + $0x40] sm:$0xff] %v955
        %979 = vst [vmem:[%s272 + $0x48] sm:$0xff] %v957
        %980 = vst [vmem:[%s272 + $0x50] sm:$0xff] %v959
        %981 = vst [vmem:[%s272 + $0x58] sm:$0xff] %v961
        %982 = vst [vmem:[%s272 + $0x60] sm:$0xff] %v963
        %983 = vst [vmem:[%s272 + $0x68] sm:$0xff] %v965
        %984 = vst [vmem:[%s272 + $0x70] sm:$0xff] %v967
        %985 = vst [vmem:[%s272 + $0x78] sm:$0xff] %v969
        %s986 = sand.u32 %s181, 1
        %s987 = scalar_lea.sflag [#allocation3], %s986
        %s988 = sand.u32 %s181, 1
        %s989 = smul.addr %s988, 128
        %s990 = scalar_lea.vmem [#allocation2], %s989
        // Predicated region
        $region49: #{tpu_custom_call.1} parent=47 // pred_check
          %p991 = pneg %p191
        $region50: #{tpu_custom_call.1} parent=47 // pred_check_branch
          %993 = sbr.rel (%p991) target = $region52
        $region51: #{tpu_custom_call.1} parent=47 // pred_region
          %s994 = smul.u32 16, %s21
          %s996 = ssub.s32 2048, 2048
          %997 = vsyncadd %s987, %s996
          %s998 = smul.addr %s994, 128
          %s999 = scalar_lea.hbm %s7, %s998
          %s1000 = sshll.u32 %s990, 4
          %s1001 = int_to_ptr.vmem [resolvable:$true] %s1000
          %1006 = dma.vmem_to_hbm [thread:$0]  %s1001, 2048, %s999, %s987, 128, 128, 8
        $region52: #{tpu_custom_call.1} parent=47 // pred_fallthru
          _
      $region48: #{tpu_custom_call.1} parent=5 // pred_fallthru
        _
      %p1007 = scmp.le.s32.totalorder 2, %s16
      // Predicated region
      $region53: #{tpu_custom_call.1} parent=5 // pred_check
        %p1008 = pneg %p1007
      $region54: #{tpu_custom_call.1} parent=5 // pred_check_branch
        %1010 = sbr.rel (%p1008) target = $region56
      $region55: #{tpu_custom_call.1} parent=5 // pred_region
        %s1011 = ssub.s32 %s16, 2
        // Predicated region
        $region57: #{tpu_custom_call.1} parent=55 // pred_check
          %p1012 = pneg %p197
        $region58: #{tpu_custom_call.1} parent=55 // pred_check_branch
          %1014 = sbr.rel (%p1012) target = $region60
        $region59: #{tpu_custom_call.1} parent=55 // pred_region
          %s1015 = sand.u32 %s182, 1
          %s1016 = scalar_lea.sflag [#allocation3], %s1015
          %s1017 = sand.u32 %s182, 1
          %s1018 = smul.addr %s1017, 128
          %s1019 = scalar_lea.vmem [#allocation2], %s1018
          %1020 = dma.done %s1016, 2048
        $region60: #{tpu_custom_call.1} parent=55 // pred_fallthru
          _
      $region56: #{tpu_custom_call.1} parent=5 // pred_fallthru
        _
    $region6: #{tpu_custom_call.1} parent=1 // loop_footer
      %s20 = sadd.s32 1, %s16
    $region7: #{tpu_custom_call.1} parent=1 // loop_footer_branch
      %15 = sbr.rel target = $region3
    $region8: #{tpu_custom_call.1} parent=1 // loop_exit
      _
    %1021 = vsyncpa [#allocation3], 1
    %s1022 = scalar_lea.sflag [#allocation3], 1
    %1023 = vsyncpa %s1022, 1

</llo_original>
